<compile_context>
chip_gen: v5e
topology: v5e:2x2
jax: 0.10.0
libtpu: 0.0.40
codegen_flags: <defaults>
</compile_context>

<pallas_src>
import functools

import jax
import jax.numpy as jnp
from jax import lax
from jax.experimental import pallas as pl
from jax.experimental.pallas import tpu as pltpu


_LANES = 128
_ROW_ALIGN = 32            # sublane alignment valid for f32 / bf16 / int8 tilings
_MIN_PALLAS_BATCH = 4096   # below this, fused XLA beats kernel-launch overhead


def _round_up(x, m):
    return ((x + m - 1) // m) * m


def _tpu_config():
    """(n_core_split, max_block_rows, vmem_limit_bytes) per TPU generation."""
    try:
        kind = jax.devices()[0].device_kind.lower()
    except Exception:
        kind = ""
    if "v7" in kind:
        # 2 TensorCores, 64 MiB VMEM: 4 MiB input blocks, 32 MiB scoped limit.
        return 2, 8192, 32 * 1024 * 1024
    if "lite" in kind or "v5e" in kind or "v6e" in kind or "v6" in kind:
        # Single TensorCore, 128 MiB VMEM: 8 MiB input blocks.
        return 1, 16384, 64 * 1024 * 1024
    if "v4" in kind or "v5" in kind:
        # Megacore (2 TCs sharing 128 MiB VMEM).
        return 2, 16384, 64 * 1024 * 1024
    return 1, 8192, 32 * 1024 * 1024


def _multi_mse_kernel(p_ref, t_ref, o_ref, acc_ref, *,
                      inv_b, block_rows, tiles_per_core, rows_valid):
    c = pl.program_id(0)
    t = pl.program_id(1)

    @pl.when(t == 0)
    def _init():
        acc_ref[...] = jnp.zeros_like(acc_ref)

    # Steady state: vld + vsub + vmul + vadd (pure VPU); HBM-bound.
    d = p_ref[...].astype(jnp.float32) - t_ref[...].astype(jnp.float32)
    sq = d * d

    # Global tile id -> first global row covered by this tile.
    tile_start = (c * tiles_per_core + t) * block_rows
    is_full = tile_start + block_rows <= rows_valid

    @pl.when(is_full)
    def _accumulate_full():
        acc_ref[...] += sq

    @pl.when(jnp.logical_not(is_full))
    def _accumulate_ragged():
        # Partial / over-covered tile: rows past the true extent hold garbage
        # (no host-side padding copy), so mask them out here.
        row = tile_start + lax.broadcasted_iota(jnp.int32, (block_rows, 1), 0)
        acc_ref[...] += jnp.where(row < rows_valid, sq, 0.0)

    @pl.when(t == tiles_per_core - 1)
    def _finalize():
        acc = acc_ref[...]                                    # (block_rows, 128)
        lane = lax.broadcasted_iota(jnp.int32, (1, acc.shape[1]), 1)
        even = (lane % 2) == 0                                # channel-0 lanes
        s_tot = jnp.sum(acc, keepdims=True)                   # (1, 1)
        s_even = jnp.sum(jnp.where(even, acc, 0.0), keepdims=True)
        s_odd = s_tot - s_even                                # one fewer XLU pass
        col = lax.broadcasted_iota(jnp.int32, (1, 2), 1)
        vals = jnp.where(col == 0, s_even, s_odd) * inv_b     # (1, 2)
        o_ref[...] = vals.reshape(o_ref.shape)                # (1, 1, 2)


def _multi_mse_pallas(preds, targets):
    b = preds.shape[0]
    n = b * 2
    inv_b = 1.0 / b

    n_core, max_block_rows, vmem_limit = _tpu_config()

    # Layout-free flatten; channel interleave maps to even/odd lanes (128 even).
    p_flat = preds.reshape(-1)
    t_flat = targets.reshape(-1)

    rows = pl.cdiv(n, _LANES)
    n_row_aligned = rows * _LANES
    if n_row_aligned != n:
        # Ragged last lane-row: pad to the next 128-element boundary so the
        # (rows, 128) reshape is legal.  Zero diffs contribute nothing.
        # TODO(synk): this jnp.pad still copies the inputs once when
        # B % 64 != 0; the aligned path below is fully copy-free.
        p_flat = jnp.pad(p_flat, (0, n_row_aligned - n))
        t_flat = jnp.pad(t_flat, (0, n_row_aligned - n))

    p2 = p_flat.reshape(rows, _LANES)   # free (contiguous) reshape, no copy
    t2 = t_flat.reshape(rows, _LANES)

    # Tile-grid sizing: derive block_rows from the data so over-coverage is at
    # most ~_ROW_ALIGN rows per (core, tile) instead of up to ~2x the data.
    if rows <= 64:
        n_core, tiles_per_core, block_rows = 1, 1, rows          # full-extent block
    else:
        tiles_per_core = pl.cdiv(rows, n_core * max_block_rows)
        block_rows = _round_up(pl.cdiv(rows, n_core * tiles_per_core), _ROW_ALIGN)

    last_block = pl.cdiv(rows, block_rows) - 1   # clamp target for dead tiles

    def in_index_map(c, t):
        g = c * tiles_per_core + t
        return (jnp.minimum(g, last_block), 0)   # dead tiles clamp + get masked

    in_spec = pl.BlockSpec((block_rows, _LANES), in_index_map)

    kernel = functools.partial(
        _multi_mse_kernel,
        inv_b=inv_b,
        block_rows=block_rows,
        tiles_per_core=tiles_per_core,
        rows_valid=rows,
    )

    partials = pl.pallas_call(
        kernel,
        out_shape=jax.ShapeDtypeStruct((n_core, 1, 2), jnp.float32),
        grid_spec=pltpu.PrefetchScalarGridSpec(
            num_scalar_prefetch=0,
            grid=(n_core, tiles_per_core),
            in_specs=[in_spec, in_spec],
            out_specs=pl.BlockSpec((1, 1, 2), lambda c, t: (c, 0, 0)),
            scratch_shapes=[pltpu.VMEM((block_rows, _LANES), jnp.float32)],
        ),
        compiler_params=pltpu.CompilerParams(
            dimension_semantics=("parallel", "arbitrary"),
            vmem_limit_bytes=vmem_limit,
        ),
    )(p2, t2)

    # Per-core partials are already scaled by 1/B; tiny cross-core add in XLA.
    means = jnp.sum(partials, axis=(0, 1))   # (2,)
    loss_gsw = means[0]
    loss_gbw = means[1]
    return loss_gsw + loss_gbw, loss_gsw, loss_gbw


def _multi_mse_reference(preds, targets):
    d = preds.astype(jnp.float32) - targets.astype(jnp.float32)
    m = jnp.mean(d * d, axis=0)            # (2,)
    return m[0] + m[1], m[0], m[1]


def multi_mse_loss(preds, targets, *, use_pallas=None):
    """preds, targets: (B, 2). Returns (total_loss, loss_gsw, loss_gbw)."""
    assert preds.shape == targets.shape and preds.ndim == 2 and preds.shape[1] == 2
    b = preds.shape[0]
    if use_pallas is None:
        use_pallas = b >= _MIN_PALLAS_BATCH
    if not use_pallas:
        return _multi_mse_reference(preds, targets)
    return _multi_mse_pallas(preds, targets)


def _check(batch, key, rtol, atol, use_pallas):
    k1, k2 = jax.random.split(key)
    preds = jax.random.normal(k1, (batch, 2), dtype=jnp.float32)
    targets = jax.random.normal(k2, (batch, 2), dtype=jnp.float32)

    total, gsw, gbw = jax.block_until_ready(
        multi_mse_loss(preds, targets, use_pallas=use_pallas))

    ref_total, ref_gsw, ref_gbw = _multi_mse_reference(preds, targets)
    assert jnp.allclose(gsw, ref_gsw, rtol=rtol, atol=atol), (batch, gsw, ref_gsw)
    assert jnp.allclose(gbw, ref_gbw, rtol=rtol, atol=atol), (batch, gbw, ref_gbw)
    assert jnp.allclose(total, ref_total, rtol=rtol, atol=atol), (batch, total, ref_total)


if __name__ == "__main__":
    key = jax.random.PRNGKey(0)
    k0, k1, k2 = jax.random.split(key, 3)

    # Primary small-shape check (B=8, matches the module's [batch, 2] layout),
    # forcing the Pallas path so the kernel itself is exercised.
    _check(8, k0, rtol=1e-5, atol=1e-6, use_pallas=True)

    # Aligned large batch (B % 64 == 0): fully copy-free path, ragged (masked)
    # last tile, multi-tile accumulation and the per-generation core split.
    _check(300_032, k1, rtol=1e-4, atol=1e-5, use_pallas=True)

    # Unaligned odd batch: exercises the minimal tail padding + masking path.
    _check(123_457, k2, rtol=1e-4, atol=1e-5, use_pallas=True)

    print("KERNEL_OK")
</pallas_src>

<mosaic_0001>
module attributes {stable_mosaic.version = 11 : i64} {
  func.func @_multi_mse_kernel(%arg0: i32, %arg1: i32, %arg2: memref<1x128xf32, #tpu.memory_space<vmem>>, %arg3: memref<1x128xf32, #tpu.memory_space<vmem>>, %arg4: memref<1x1x2xf32, #tpu.memory_space<vmem>>, %arg5: memref<1x128xf32, #tpu.memory_space<vmem>>) attributes {dimension_semantics = [#tpu.dimension_semantics<parallel>, #tpu.dimension_semantics<arbitrary>], iteration_bounds = array<i64: 1, 1>, scalar_prefetch = 0 : i64, scratch_operands = 1 : i64, tpu.core_type = #tpu.core_type<tc>, window_params = [{transform_indices = @transform_0, window_bounds = array<i64: 1, 128>}, {transform_indices = @transform_1, window_bounds = array<i64: 1, 128>}, {transform_indices = @transform_2, window_bounds = array<i64: 1, 1, 2>}]} {
    %c0_i32 = arith.constant 0 : i32
    %0 = arith.cmpi eq, %arg1, %c0_i32 : i32
    %1 = arith.extui %0 : i1 to i32
    %c0_i32_0 = arith.constant 0 : i32
    %2 = arith.cmpi ne, %1, %c0_i32_0 : i32
    scf.if %2 {
      %cst = arith.constant 0.000000e+00 : f32
      %20 = vector.broadcast %cst : f32 to vector<1x128xf32>
      %c0_11 = arith.constant 0 : index
      %c0_12 = arith.constant 0 : index
      %21 = vector.load %arg5[%c0_11, %c0_12] : memref<1x128xf32, #tpu.memory_space<vmem>>, vector<1x128xf32>
      tpu.vector_store %arg5[%c0_11, %c0_12], %20 {strides = array<i32>} : memref<1x128xf32, #tpu.memory_space<vmem>>, vector<1x128xf32>,
    } else {
    }
    %c0 = arith.constant 0 : index
    %c0_1 = arith.constant 0 : index
    %3 = vector.load %arg2[%c0, %c0_1] : memref<1x128xf32, #tpu.memory_space<vmem>>, vector<1x128xf32>
    %c0_2 = arith.constant 0 : index
    %c0_3 = arith.constant 0 : index
    %4 = vector.load %arg3[%c0_2, %c0_3] : memref<1x128xf32, #tpu.memory_space<vmem>>, vector<1x128xf32>
    %5 = arith.subf %3, %4 : vector<1x128xf32>
    %6 = arith.mulf %5, %5 : vector<1x128xf32>
    %c1_i32 = arith.constant 1 : i32
    %7 = arith.muli %arg0, %c1_i32 : i32
    %8 = arith.addi %7, %arg1 : i32
    %c1_i32_4 = arith.constant 1 : i32
    %9 = arith.muli %8, %c1_i32_4 : i32
    %c1_i32_5 = arith.constant 1 : i32
    %10 = arith.addi %9, %c1_i32_5 : i32
    %c1_i32_6 = arith.constant 1 : i32
    %11 = arith.cmpi sle, %10, %c1_i32_6 : i32
    %12 = arith.extui %11 : i1 to i32
    %c0_i32_7 = arith.constant 0 : i32
    %13 = arith.cmpi ne, %12, %c0_i32_7 : i32
    scf.if %13 {
      %c0_11 = arith.constant 0 : index
      %c0_12 = arith.constant 0 : index
      %20 = vector.load %arg5[%c0_11, %c0_12] : memref<1x128xf32, #tpu.memory_space<vmem>>, vector<1x128xf32>
      %21 = arith.addf %20, %6 : vector<1x128xf32>
      %c0_13 = arith.constant 0 : index
      %c0_14 = arith.constant 0 : index
      %22 = vector.load %arg5[%c0_13, %c0_14] : memref<1x128xf32, #tpu.memory_space<vmem>>, vector<1x128xf32>
      tpu.vector_store %arg5[%c0_13, %c0_14], %21 {strides = array<i32>} : memref<1x128xf32, #tpu.memory_space<vmem>>, vector<1x128xf32>,
    } else {
    }
    %true = arith.constant true
    %14 = arith.xori %11, %true : i1
    %15 = arith.extui %14 : i1 to i32
    %c0_i32_8 = arith.constant 0 : i32
    %16 = arith.cmpi ne, %15, %c0_i32_8 : i32
    scf.if %16 {
      %20 = tpu.iota {dimensions = array<i32: 0>} : vector<1x1xi32>
      %21 = vector.broadcast %9 : i32 to vector<1x1xi32>
      %22 = arith.addi %21, %20 : vector<1x1xi32>
      %c0_11 = arith.constant 0 : index
      %c0_12 = arith.constant 0 : index
      %23 = vector.load %arg5[%c0_11, %c0_12] : memref<1x128xf32, #tpu.memory_space<vmem>>, vector<1x128xf32>
      %c1_i32_13 = arith.constant 1 : i32
      %24 = vector.broadcast %c1_i32_13 : i32 to vector<1x1xi32>
      %25 = arith.cmpi slt, %22, %24 : vector<1x1xi32>
      %cst = arith.constant 0.000000e+00 : f32
      %26 = vector.shape_cast %25 : vector<1x1xi1> to vector<1x1xi1>
      %27 = vector.broadcast %26 : vector<1x1xi1> to vector<1x128xi1>
      %28 = vector.broadcast %cst : f32 to vector<1x128xf32>
      %29 = arith.select %27, %6, %28 : vector<1x128xi1>, vector<1x128xf32>
      %30 = arith.addf %23, %29 : vector<1x128xf32>
      %c0_14 = arith.constant 0 : index
      %c0_15 = arith.constant 0 : index
      %31 = vector.load %arg5[%c0_14, %c0_15] : memref<1x128xf32, #tpu.memory_space<vmem>>, vector<1x128xf32>
      tpu.vector_store %arg5[%c0_14, %c0_15], %30 {strides = array<i32>} : memref<1x128xf32, #tpu.memory_space<vmem>>, vector<1x128xf32>,
    } else {
    }
    %c0_i32_9 = arith.constant 0 : i32
    %17 = arith.cmpi eq, %arg1, %c0_i32_9 : i32
    %18 = arith.extui %17 : i1 to i32
    %c0_i32_10 = arith.constant 0 : i32
    %19 = arith.cmpi ne, %18, %c0_i32_10 : i32
    scf.if %19 {
      %c0_11 = arith.constant 0 : index
      %c0_12 = arith.constant 0 : index
      %20 = vector.load %arg5[%c0_11, %c0_12] : memref<1x128xf32, #tpu.memory_space<vmem>>, vector<1x128xf32>
      %21 = tpu.iota {dimensions = array<i32: 1>} : vector<1x128xi32>
      %c2_i32 = arith.constant 2 : i32
      %c0_i32_13 = arith.constant 0 : i32
      %22 = arith.cmpi eq, %c2_i32, %c0_i32_13 : i32
      %c1_i32_14 = arith.constant 1 : i32
      %23 = arith.select %22, %c1_i32_14, %c2_i32 : i32
      %24 = vector.broadcast %23 : i32 to vector<1x128xi32>
      %25 = arith.remsi %21, %24 : vector<1x128xi32>
      %c0_i32_15 = arith.constant 0 : i32
      %26 = vector.broadcast %c0_i32_15 : i32 to vector<1x128xi32>
      %27 = arith.cmpi ne, %25, %26 : vector<1x128xi32>
      %c0_i32_16 = arith.constant 0 : i32
      %28 = vector.broadcast %c0_i32_16 : i32 to vector<1x128xi32>
      %29 = arith.cmpi slt, %25, %28 : vector<1x128xi32>
      %c0_i32_17 = arith.constant 0 : i32
      %30 = arith.cmpi slt, %23, %c0_i32_17 : i32
      %31 = vector.broadcast %30 : i1 to vector<1x128xi1>
      %32 = vector.broadcast %31 : vector<1x128xi1> to vector<1x128xi1>
      %33 = arith.xori %29, %32 : vector<1x128xi1>
      %34 = arith.andi %33, %27 : vector<1x128xi1>
      %35 = vector.broadcast %23 : i32 to vector<1x128xi32>
      %36 = arith.addi %25, %35 : vector<1x128xi32>
      %37 = arith.select %34, %36, %25 : vector<1x128xi1>, vector<1x128xi32>
      %c0_i32_18 = arith.constant 0 : i32
      %38 = vector.broadcast %c0_i32_18 : i32 to vector<1x128xi32>
      %39 = arith.cmpi eq, %37, %38 : vector<1x128xi32>
      %40 = vector.shape_cast %20 : vector<1x128xf32> to vector<1x1x128xf32>
      %cst = arith.constant dense<0.000000e+00> : vector<1xf32>
      %41 = vector.multi_reduction <add>, %40, %cst [1, 2] : vector<1x1x128xf32> to vector<1xf32>
      %42 = vector.shape_cast %41 : vector<1xf32> to vector<1x1x1xf32>
      %43 = vector.extract %42[0, 0, 0] : f32 from vector<1x1x1xf32>
      %44 = vector.broadcast %43 : f32 to vector<1x1xf32>
      %cst_19 = arith.constant 0.000000e+00 : f32
      %45 = vector.broadcast %cst_19 : f32 to vector<1x128xf32>
      %46 = arith.select %39, %20, %45 : vector<1x128xi1>, vector<1x128xf32>
      %47 = vector.shape_cast %46 : vector<1x128xf32> to vector<1x1x128xf32>
      %cst_20 = arith.constant dense<0.000000e+00> : vector<1xf32>
      %48 = vector.multi_reduction <add>, %47, %cst_20 [1, 2] : vector<1x1x128xf32> to vector<1xf32>
      %49 = vector.shape_cast %48 : vector<1xf32> to vector<1x1x1xf32>
      %50 = vector.extract %49[0, 0, 0] : f32 from vector<1x1x1xf32>
      %51 = vector.broadcast %50 : f32 to vector<1x1xf32>
      %52 = arith.subf %44, %51 : vector<1x1xf32>
      %53 = tpu.iota {dimensions = array<i32: 1>} : vector<1x2xi32>
      %c0_i32_21 = arith.constant 0 : i32
      %54 = vector.broadcast %c0_i32_21 : i32 to vector<1x2xi32>
      %55 = arith.cmpi eq, %53, %54 : vector<1x2xi32>
      %56 = vector.shape_cast %51 : vector<1x1xf32> to vector<1x1xf32>
      %57 = vector.broadcast %56 : vector<1x1xf32> to vector<1x2xf32>
      %58 = vector.shape_cast %52 : vector<1x1xf32> to vector<1x1xf32>
      %59 = vector.broadcast %58 : vector<1x1xf32> to vector<1x2xf32>
      %60 = arith.select %55, %57, %59 : vector<1x2xi1>, vector<1x2xf32>
      %cst_22 = arith.constant 1.250000e-01 : f32
      %61 = vector.broadcast %cst_22 : f32 to vector<1x2xf32>
      %62 = arith.mulf %60, %61 : vector<1x2xf32>
      %63 = vector.shape_cast %62 : vector<1x2xf32> to vector<1x1x2xf32>
      %c0_23 = arith.constant 0 : index
      %c0_24 = arith.constant 0 : index
      %c0_25 = arith.constant 0 : index
      %64 = vector.load %arg4[%c0_23, %c0_24, %c0_25] : memref<1x1x2xf32, #tpu.memory_space<vmem>>, vector<1x1x2xf32>
      tpu.vector_store %arg4[%c0_23, %c0_24, %c0_25], %63 {strides = array<i32>} : memref<1x1x2xf32, #tpu.memory_space<vmem>>, vector<1x1x2xf32>,
    } else {
    }
    return
  }
  func.func @transform_0(%arg0: i32, %arg1: i32) -> (i32, i32) {
    %c1_i32 = arith.constant 1 : i32
    %0 = arith.muli %arg0, %c1_i32 : i32
    %1 = arith.addi %0, %arg1 : i32
    %c0_i32 = arith.constant 0 : i32
    %2 = arith.minsi %1, %c0_i32 : i32
    %c0_i32_0 = arith.constant 0 : i32
    %c0_i32_1 = arith.constant 0 : i32
    return %2, %c0_i32_0 : i32, i32
  }
  func.func @transform_1(%arg0: i32, %arg1: i32) -> (i32, i32) {
    %c1_i32 = arith.constant 1 : i32
    %0 = arith.muli %arg0, %c1_i32 : i32
    %1 = arith.addi %0, %arg1 : i32
    %c0_i32 = arith.constant 0 : i32
    %2 = arith.minsi %1, %c0_i32 : i32
    %c0_i32_0 = arith.constant 0 : i32
    %c0_i32_1 = arith.constant 0 : i32
    return %2, %c0_i32_0 : i32, i32
  }
  func.func @transform_2(%arg0: i32, %arg1: i32) -> (i32, i32, i32) {
    %c0_i32 = arith.constant 0 : i32
    %c0_i32_0 = arith.constant 0 : i32
    %c0_i32_1 = arith.constant 0 : i32
    return %arg0, %c0_i32, %c0_i32_0 : i32, i32, i32
  }
}

</mosaic_0001>

<llo_original>
// kernel: tpu_custom_call.1
$region0: #{tpu_custom_call.1}
  #allocation0 [shape = 'u32[]', space=smem, size = 0x4, offset = 0x4, fixed_abs, tag = 'smem constant byte address 0x4 - core index']
  #allocation1 [shape = 'u32[72,128]{1,0:T(1,128)}', space=vmem, size = 0x9000, scoped, tag = 'internal scratch']
  #allocation2 [shape = 'f32[1,128]{1,0:T(1,128)}', space=vmem, size = 0x200, scoped, tag = 'scratch operand']
  %s0 = inlined_call_operand.hbm [shape: f32[1,128], index: 0, kind: input, shape index: {}]
  %s1 = inlined_call_operand.hbm [shape: f32[1,128], index: 1, kind: input, shape index: {}]
  %s2 = inlined_call_operand.hbm [shape: f32[1,1,2], index: 2, kind: output, shape index: {}]
  %s3 = sld [smem:[#allocation0]]
  $region42: #{tpu_custom_call.1} parent=0
    _
  %s5 = ssub.s32 1, %s3
  %s6 = scalar_select 0, %s5, %s3
  $region1: #{tpu_custom_call.1} parent=0
    #allocation3 [shape = 'u8[512]{0}', space=vmem, size = 0x400, scoped, tag = 'input window, operand 0, single buffered']
    #allocation4 [shape = 's32[1]{0}', space=sflag, size = 0x4, scoped, tag = 'scoped memory for tpu_custom_call.1']
    #allocation5 [shape = 's32[1]{0}', space=sflag, size = 0x4, scoped, tag = 'scoped memory for tpu_custom_call.1']
    #allocation6 [shape = 'u8[512]{0}', space=vmem, size = 0x400, scoped, tag = 'input window, operand 1, single buffered']
    #allocation7 [shape = 's32[1]{0}', space=sflag, size = 0x4, scoped, tag = 'scoped memory for tpu_custom_call.1']
    #allocation8 [shape = 'u8[512]{0}', space=vmem, size = 0x400, scoped, tag = 'output window, operand 0, single buffered']
    %7 = vsyncpa [#allocation4], 0
    %8 = vsyncpa [#allocation7], 0
    %9 = vsyncpa [#allocation5], 0
    // Predicated region
    $region2: #{tpu_custom_call.1} parent=1 // pred_check
      _
    $region3: #{tpu_custom_call.1} parent=1 // pred_check_branch
      %11 = sbr.rel (0) target = $region5
    $region4: #{tpu_custom_call.1} parent=1 // pred_region
      %s12 = sadd.s32 0, 0
      %p13 = scmp.lt.s32.totalorder %s12, 0
      %s14 = scalar_select %p13, %s12, 0
      %16 = vsyncadd [#allocation4], 0
      %s17 = scalar_lea.hbm %s0, %s14
      %s19 = sshll.u32 %s17, 4
      %s20 = int_to_ptr.hbm [resolvable:$true] %s19
      %s21 = sshll.u32 [#allocation3], 4
      %s22 = int_to_ptr.vmem [resolvable:$true] %s21
      %24 = dma.hbm_to_vmem [thread:$0]  %s20, 16, %s22, [#allocation4]
    $region5: #{tpu_custom_call.1} parent=1 // pred_fallthru
      _
    // Predicated region
    $region6: #{tpu_custom_call.1} parent=1 // pred_check
      _
    $region7: #{tpu_custom_call.1} parent=1 // pred_check_branch
      %26 = sbr.rel (0) target = $region9
    $region8: #{tpu_custom_call.1} parent=1 // pred_region
      %s27 = sadd.s32 0, 0
      %p28 = scmp.lt.s32.totalorder %s27, 0
      %s29 = scalar_select %p28, %s27, 0
      %31 = vsyncadd [#allocation7], 0
      %s32 = scalar_lea.hbm %s1, %s29
      %s34 = sshll.u32 %s32, 4
      %s35 = int_to_ptr.hbm [resolvable:$true] %s34
      %s36 = sshll.u32 [#allocation6], 4
      %s37 = int_to_ptr.vmem [resolvable:$true] %s36
      %39 = dma.hbm_to_vmem [thread:$0]  %s35, 16, %s37, [#allocation7]
    $region9: #{tpu_custom_call.1} parent=1 // pred_fallthru
      _
    // Predicated region
    $region10: #{tpu_custom_call.1} parent=1 // pred_check
      _
    $region11: #{tpu_custom_call.1} parent=1 // pred_check_branch
      %41 = sbr.rel (0) target = $region13
    $region12: #{tpu_custom_call.1} parent=1 // pred_region
      %43 = dma.done [#allocation4], 16
    $region13: #{tpu_custom_call.1} parent=1 // pred_fallthru
      _
    // Predicated region
    $region14: #{tpu_custom_call.1} parent=1 // pred_check
      _
    $region15: #{tpu_custom_call.1} parent=1 // pred_check_branch
      %45 = sbr.rel (0) target = $region17
    $region16: #{tpu_custom_call.1} parent=1 // pred_region
      %47 = dma.done [#allocation7], 16
    $region17: #{tpu_custom_call.1} parent=1 // pred_fallthru
      _
    %s48 = sadd.s32 0, 0
    %p49 = scmp.lt.s32.totalorder %s48, 0
    %s50 = scalar_select %p49, %s48, 0
    %s51 = sadd.s32 0, 0
    %p52 = scmp.lt.s32.totalorder %s51, 0
    %s53 = scalar_select %p52, %s51, 0
    %p54 = scmp.eq.s32.totalorder 0, 0
    // Predicated region
    $region18: #{tpu_custom_call.1} parent=1 // pred_check
      %p55 = pneg %p54
    $region19: #{tpu_custom_call.1} parent=1 // pred_check_branch
      %57 = sbr.rel (%p55) target = $region21
    $region20: #{tpu_custom_call.1} parent=1 // pred_region
      %58 = vst [vmem:[#allocation2] sm:$0x1] 0.0
    $region21: #{tpu_custom_call.1} parent=1 // pred_fallthru
      _
    %v59 = vld [vmem:[#allocation3] sm:$0x1]
    %v60 = vld [vmem:[#allocation6] sm:$0x1]
    %v61 = vsub.f32 %v59, %v60
    %v62 = vmul.f32 %v61, %v61
    %s63 = sadd.s32 0, 0
    %s64 = sadd.s32 %s63, 1
    %p65 = scmp.le.s32.totalorder %s64, 1
    // Predicated region
    $region22: #{tpu_custom_call.1} parent=1 // pred_check
      %p66 = pneg %p65
    $region23: #{tpu_custom_call.1} parent=1 // pred_check_branch
      %68 = sbr.rel (%p66) target = $region25
    $region24: #{tpu_custom_call.1} parent=1 // pred_region
      %v69 = vld [vmem:[#allocation2] sm:$0x1]
      %v70 = vadd.f32 %v69, %v62
      %71 = vst [vmem:[#allocation2] sm:$0x1] %v70
    $region25: #{tpu_custom_call.1} parent=1 // pred_fallthru
      _
    %p72 = scmp.gt.s32.totalorder %s64, 1
    // Predicated region
    $region26: #{tpu_custom_call.1} parent=1 // pred_check
      %p73 = pneg %p72
    $region27: #{tpu_custom_call.1} parent=1 // pred_check_branch
      %75 = sbr.rel (%p73) target = $region29
    $region28: #{tpu_custom_call.1} parent=1 // pred_region
      %v76 = vlaneseq
      %v77 = vshrl.u32 %v76, 7
      %v78 = vstv %s63
      %v79 = vadd.s32 %v78, %v77
      %v80 = vld [vmem:[#allocation2] sm:$0x1]
      %vm81 = vcmp.lt.s32.totalorder %v79, 1
      %v82 = vsel %vm81, 1, 0
      %vm83 = vcmp.eq.s32.totalorder %v82, 1
      %v84 = vsel %vm83, %v62, 0.0
      %v85 = vadd.f32 %v80, %v84
      %86 = vst [vmem:[#allocation2] sm:$0x1] %v85
    $region29: #{tpu_custom_call.1} parent=1 // pred_fallthru
      _
    // Predicated region
    $region30: #{tpu_custom_call.1} parent=1 // pred_check
      %p87 = pneg %p54
    $region31: #{tpu_custom_call.1} parent=1 // pred_check_branch
      %89 = sbr.rel (%p87) target = $region33
    $region32: #{tpu_custom_call.1} parent=1 // pred_region
      %v90 = vld [vmem:[#allocation2] sm:$0x1]
      %v91 = vlaneseq
      %v92 = vand.u32 %v91, 127
      %vm93 = vcmp.lt.s32.totalorder %v92, 0
      %v94 = vsub.s32 0, %v92
      %v95 = vsel %vm93, %v94, %v92
      %v96 = vshrl.u32 %v95, 1
      %v97 = vand.u32 %v95, 1
      %v98 = vsub.s32 0, %v97
      %v99 = vsel %vm93, %v98, %v97
      %vm100 = vcmp.ne.s32.totalorder %v99, 0
      %vm101 = vcmp.lt.s32.totalorder %v99, 0
      %vm102 = vmand %vm101, %vm100
      %v103 = vadd.s32 %v99, 2
      %v104 = vsel %vm102, %v103, %v99
      %vm105 = vcmp.eq.s32.totalorder %v104, 0
      %vm106 = vcmask 1040384
      %v107 = vsel %vm106, %v90, 0.0
      %108 = vadd.xlane.f32.xlu0 %v107
      %v109 = vpop.xlane.xlu0 %108
      %v110 = vrot.slane %v109, 4
      %v111 = vadd.f32 %v109, %v110
      %v112 = vrot.slane %v111, 2
      %v113 = vadd.f32 %v111, %v112
      %v114 = vrot.slane %v113, 1
      %v115 = vadd.f32 %v113, %v114
      %s116 = vtos %v115
      %v117 = vstv %s116
      %v118 = vsel %vm105, %v90, 0.0
      %v119 = vsel %vm106, %v118, 0.0
      %120 = vadd.xlane.f32.xlu0 %v119
      %v121 = vpop.xlane.xlu0 %120
      %v122 = vrot.slane %v121, 4
      %v123 = vadd.f32 %v121, %v122
      %v124 = vrot.slane %v123, 2
      %v125 = vadd.f32 %v123, %v124
      %v126 = vrot.slane %v125, 1
      %v127 = vadd.f32 %v125, %v126
      %s128 = vtos %v127
      %v129 = vstv %s128
      %v130 = vsub.f32 %v117, %v129
      %vm131 = vcmp.eq.s32.totalorder %v92, 0
      %v132 = vsel %vm131, %v129, %v130
      %v133 = vmul.f32 %v132, 0.125
      %vm134 = vcmask 8192
      %135 = vst.msk [vmem:[#allocation8] sm:$0x1] %vm134, %v133
    $region33: #{tpu_custom_call.1} parent=1 // pred_fallthru
      _
    // Predicated region
    $region34: #{tpu_custom_call.1} parent=1 // pred_check
      _
    $region35: #{tpu_custom_call.1} parent=1 // pred_check_branch
      %137 = sbr.rel (0) target = $region37
    $region36: #{tpu_custom_call.1} parent=1 // pred_region
      %139 = vsyncadd [#allocation5], 0
      %s141 = sshll.u32 [#allocation8], 4
      %s142 = int_to_ptr.vmem [resolvable:$true] %s141
      %s143 = sshll.u32 %s2, 4
      %s144 = int_to_ptr.hbm [resolvable:$true] %s143
      %146 = dma.vmem_to_hbm [thread:$0]  %s142, 16, %s144, [#allocation5]
    $region37: #{tpu_custom_call.1} parent=1 // pred_fallthru
      _
    // Predicated region
    $region38: #{tpu_custom_call.1} parent=1 // pred_check
      _
    $region39: #{tpu_custom_call.1} parent=1 // pred_check_branch
      %148 = sbr.rel (0) target = $region41
    $region40: #{tpu_custom_call.1} parent=1 // pred_region
      %150 = dma.done [#allocation5], 16
    $region41: #{tpu_custom_call.1} parent=1 // pred_fallthru
      _
    %151 = vsyncpa [#allocation4], 1
    %152 = vsyncpa [#allocation7], 1
    %153 = vsyncpa [#allocation5], 1

</llo_original>
